<compile_context>
chip_gen: v6e
topology: v6e:2x2x1
jax: 0.10.0
libtpu: 0.0.40
codegen_flags: <defaults>
</compile_context>

<pallas_src>
import functools

import jax
import jax.numpy as jnp
from jax.experimental import pallas as pl
from jax.experimental.pallas import tpu as pltpu


def _classifier_kernel(x_ref,
                       w1_ref, b1_ref,
                       w2_ref, b2_ref,
                       w3_ref, b3_ref,
                       w4_ref, b4_ref,
                       o_ref):
    """Fused MLP + softmax for one tile of batch rows.

    x / weights are bf16 (MXU-native, f32 accumulate); bias add, ReLU and the
    softmax epilogue are done in f32.  All weights/biases live fully in VMEM;
    only the batch axis is tiled by the grid.
    """
    # Layer 1: Linear(dim -> dim//2) + ReLU   (Dropout = identity in eval)
    h = jnp.dot(x_ref[...], w1_ref[...], preferred_element_type=jnp.float32)
    h = jnp.maximum(h + b1_ref[...], 0.0)

    # Layer 2: Linear(dim//2 -> dim//4) + ReLU
    h = jnp.dot(h.astype(w2_ref.dtype), w2_ref[...],
                preferred_element_type=jnp.float32)
    h = jnp.maximum(h + b2_ref[...], 0.0)

    # Layer 3: Linear(dim//4 -> dim//8) + ReLU
    h = jnp.dot(h.astype(w3_ref.dtype), w3_ref[...],
                preferred_element_type=jnp.float32)
    h = jnp.maximum(h + b3_ref[...], 0.0)

    # Layer 4: Linear(dim//8 -> c)
    logits = jnp.dot(h.astype(w4_ref.dtype), w4_ref[...],
                     preferred_element_type=jnp.float32) + b4_ref[...]

    # Softmax over the last axis (numerically stable, f32).
    m = jnp.max(logits, axis=-1, keepdims=True)
    e = jnp.exp(logits - m)
    denom = jnp.sum(e, axis=-1, keepdims=True)
    # EUP reciprocal (free slot next to exp) + one Newton step for f32 accuracy.
    inv = pl.reciprocal(denom, approx=True)
    inv = inv * (2.0 - denom * inv)
    o_ref[...] = (e * inv).astype(o_ref.dtype)


def _pick_block_b(B):
    """Large batch tile, but guarantee >=2 grid steps when possible (v7x dual TC)."""
    if B >= 2048:
        return 1024
    if B >= 16:
        return max(8, (B // 2 // 8) * 8)   # ~B/2, multiple of 8 -> >=2 steps
    return 8


@functools.partial(jax.jit, static_argnames=("block_b",))
def classifier_forward(x, params, block_b=None):
    """x: (B, dim) float32/bfloat16.  params: dict of weights (in,out), biases (1,out)."""
    B, dim = x.shape
    c = params["w4"].shape[1]
    if block_b is None:
        block_b = _pick_block_b(B)
    grid = (pl.cdiv(B, block_b),)

    compute_dtype = jnp.bfloat16
    x_in = x.astype(compute_dtype)

    # Full (untiled) blocks for every parameter; only x / out are tiled on batch.
    def full_spec(arr):
        return pl.BlockSpec(arr.shape, lambda i: (0,) * arr.ndim)

    in_specs = [pl.BlockSpec((block_b, dim), lambda i: (i, 0))]
    args = [x_in]
    for idx in range(1, 5):
        w = params[f"w{idx}"].astype(compute_dtype)   # bf16 weights -> MXU
        b = params[f"b{idx}"].astype(jnp.float32)     # f32 bias add
        in_specs.append(full_spec(w))
        args.append(w)
        in_specs.append(full_spec(b))
        args.append(b)

    out = pl.pallas_call(
        _classifier_kernel,
        out_shape=jax.ShapeDtypeStruct((B, c), jnp.float32),
        grid_spec=pltpu.PrefetchScalarGridSpec(
            num_scalar_prefetch=0,
            grid=grid,
            in_specs=in_specs,
            out_specs=pl.BlockSpec((block_b, c), lambda i: (i, 0)),
        ),
        compiler_params=pltpu.CompilerParams(
            dimension_semantics=("parallel",)),
    )(*args)
    return out


def init_params(key, dim, c):
    """Deterministic init mimicking nn.Linear (uniform +- 1/sqrt(fan_in))."""
    dims = [dim, dim // 2, dim // 4, dim // 8, c]
    params = {}
    for idx in range(4):
        fan_in, fan_out = dims[idx], dims[idx + 1]
        key, kw, kb = jax.random.split(key, 3)
        bound = 1.0 / jnp.sqrt(fan_in)
        params[f"w{idx + 1}"] = jax.random.uniform(
            kw, (fan_in, fan_out), jnp.float32, -bound, bound)
        params[f"b{idx + 1}"] = jax.random.uniform(
            kb, (1, fan_out), jnp.float32, -bound, bound)
    return params


def reference_forward_f32(x, params):
    """Pure f32 reference (matches the PyTorch module in eval mode)."""
    h = x
    for idx in range(1, 4):
        h = jnp.maximum(h @ params[f"w{idx}"] + params[f"b{idx}"], 0.0)
    logits = h @ params["w4"] + params["b4"]
    return jax.nn.softmax(logits, axis=-1)


def reference_forward_bf16(x, params):
    """Reference mirroring the kernel's precision: bf16 matmul operands, f32 accumulate."""
    h = x.astype(jnp.bfloat16)
    logits = None
    for idx in range(1, 5):
        w = params[f"w{idx}"].astype(jnp.bfloat16)
        acc = jnp.dot(h.astype(jnp.bfloat16), w,
                      preferred_element_type=jnp.float32) + params[f"b{idx}"]
        if idx < 4:
            h = jnp.maximum(acc, 0.0)
        else:
            logits = acc
    return jax.nn.softmax(logits, axis=-1)


if __name__ == "__main__":
    dim = 32   # -> hidden sizes 16, 8, 4
    c = 8      # number of classes
    B = 256    # batch (auto block_b -> 128, grid=(2,) so both v7x TCs get work)

    key = jax.random.PRNGKey(0)
    key, kx = jax.random.split(key)
    x = jax.random.normal(kx, (B, dim), jnp.float32)
    params = init_params(key, dim, c)

    out = classifier_forward(x, params)
    out = jax.block_until_ready(out)

    ref_bf16 = reference_forward_bf16(x, params)   # same precision recipe as kernel
    ref_f32 = reference_forward_f32(x, params)     # module semantics in pure f32

    assert out.shape == (B, c), out.shape
    assert jnp.allclose(out, ref_bf16, atol=1e-4, rtol=1e-4), "mismatch vs bf16 reference"
    assert jnp.allclose(out, ref_f32, atol=5e-2, rtol=5e-2), "mismatch vs f32 reference"
    assert jnp.allclose(jnp.sum(out, axis=-1), 1.0, atol=1e-4), "softmax rows must sum to 1"

    print("KERNEL_OK")
</pallas_src>

<mosaic_0001>
module attributes {stable_mosaic.version = 11 : i64} {
  func.func @_classifier_kernel(%arg0: i32, %arg1: memref<128x32xbf16, #tpu.memory_space<vmem>>, %arg2: memref<32x16xbf16, #tpu.memory_space<vmem>>, %arg3: memref<1x16xf32, #tpu.memory_space<vmem>>, %arg4: memref<16x8xbf16, #tpu.memory_space<vmem>>, %arg5: memref<1x8xf32, #tpu.memory_space<vmem>>, %arg6: memref<8x4xbf16, #tpu.memory_space<vmem>>, %arg7: memref<1x4xf32, #tpu.memory_space<vmem>>, %arg8: memref<4x8xbf16, #tpu.memory_space<vmem>>, %arg9: memref<1x8xf32, #tpu.memory_space<vmem>>, %arg10: memref<128x8xf32, #tpu.memory_space<vmem>>) attributes {dimension_semantics = [#tpu.dimension_semantics<parallel>], iteration_bounds = array<i64: 2>, scalar_prefetch = 0 : i64, scratch_operands = 0 : i64, tpu.core_type = #tpu.core_type<tc>, window_params = [{transform_indices = @transform_0, window_bounds = array<i64: 128, 32>}, {pipeline_mode = #tpu.pipeline_mode<synchronous>, transform_indices = @transform_1, window_bounds = array<i64: 32, 16>}, {pipeline_mode = #tpu.pipeline_mode<synchronous>, transform_indices = @transform_2, window_bounds = array<i64: 1, 16>}, {pipeline_mode = #tpu.pipeline_mode<synchronous>, transform_indices = @transform_3, window_bounds = array<i64: 16, 8>}, {pipeline_mode = #tpu.pipeline_mode<synchronous>, transform_indices = @transform_4, window_bounds = array<i64: 1, 8>}, {pipeline_mode = #tpu.pipeline_mode<synchronous>, transform_indices = @transform_5, window_bounds = array<i64: 8, 4>}, {pipeline_mode = #tpu.pipeline_mode<synchronous>, transform_indices = @transform_6, window_bounds = array<i64: 1, 4>}, {pipeline_mode = #tpu.pipeline_mode<synchronous>, transform_indices = @transform_7, window_bounds = array<i64: 4, 8>}, {pipeline_mode = #tpu.pipeline_mode<synchronous>, transform_indices = @transform_8, window_bounds = array<i64: 1, 8>}, {transform_indices = @transform_9, window_bounds = array<i64: 128, 8>}]} {
    %c0 = arith.constant 0 : index
    %c0_0 = arith.constant 0 : index
    %0 = vector.load %arg1[%c0, %c0_0] : memref<128x32xbf16, #tpu.memory_space<vmem>>, vector<128x32xbf16>
    %c0_1 = arith.constant 0 : index
    %c0_2 = arith.constant 0 : index
    %1 = vector.load %arg2[%c0_1, %c0_2] : memref<32x16xbf16, #tpu.memory_space<vmem>>, vector<32x16xbf16>
    %cst = arith.constant dense<0.000000e+00> : vector<128x16xf32>
    %2 = tpu.matmul %0, %1, %cst {dimension_numbers = #tpu.dot_dimension_numbers<[1], [0], [0], [1], [0, 0, 1, 1], [], []>} : vector<128x32xbf16>, vector<32x16xbf16>, vector<128x16xf32> -> vector<128x16xf32>
    %c0_3 = arith.constant 0 : index
    %c0_4 = arith.constant 0 : index
    %3 = vector.load %arg3[%c0_3, %c0_4] : memref<1x16xf32, #tpu.memory_space<vmem>>, vector<1x16xf32>
    %4 = vector.broadcast %3 : vector<1x16xf32> to vector<128x16xf32>
    %5 = arith.addf %2, %4 : vector<128x16xf32>
    %cst_5 = arith.constant 0.000000e+00 : f32
    %6 = vector.broadcast %cst_5 : f32 to vector<128x16xf32>
    %7 = arith.maximumf %5, %6 : vector<128x16xf32>
    %8 = arith.truncf %7 : vector<128x16xf32> to vector<128x16xbf16>
    %c0_6 = arith.constant 0 : index
    %c0_7 = arith.constant 0 : index
    %9 = vector.load %arg4[%c0_6, %c0_7] : memref<16x8xbf16, #tpu.memory_space<vmem>>, vector<16x8xbf16>
    %cst_8 = arith.constant dense<0.000000e+00> : vector<128x8xf32>
    %10 = tpu.matmul %8, %9, %cst_8 {dimension_numbers = #tpu.dot_dimension_numbers<[1], [0], [0], [1], [0, 0, 1, 1], [], []>} : vector<128x16xbf16>, vector<16x8xbf16>, vector<128x8xf32> -> vector<128x8xf32>
    %c0_9 = arith.constant 0 : index
    %c0_10 = arith.constant 0 : index
    %11 = vector.load %arg5[%c0_9, %c0_10] : memref<1x8xf32, #tpu.memory_space<vmem>>, vector<1x8xf32>
    %12 = vector.broadcast %11 : vector<1x8xf32> to vector<128x8xf32>
    %13 = arith.addf %10, %12 : vector<128x8xf32>
    %cst_11 = arith.constant 0.000000e+00 : f32
    %14 = vector.broadcast %cst_11 : f32 to vector<128x8xf32>
    %15 = arith.maximumf %13, %14 : vector<128x8xf32>
    %16 = arith.truncf %15 : vector<128x8xf32> to vector<128x8xbf16>
    %c0_12 = arith.constant 0 : index
    %c0_13 = arith.constant 0 : index
    %17 = vector.load %arg6[%c0_12, %c0_13] : memref<8x4xbf16, #tpu.memory_space<vmem>>, vector<8x4xbf16>
    %cst_14 = arith.constant dense<0.000000e+00> : vector<128x4xf32>
    %18 = tpu.matmul %16, %17, %cst_14 {dimension_numbers = #tpu.dot_dimension_numbers<[1], [0], [0], [1], [0, 0, 1, 1], [], []>} : vector<128x8xbf16>, vector<8x4xbf16>, vector<128x4xf32> -> vector<128x4xf32>
    %c0_15 = arith.constant 0 : index
    %c0_16 = arith.constant 0 : index
    %19 = vector.load %arg7[%c0_15, %c0_16] : memref<1x4xf32, #tpu.memory_space<vmem>>, vector<1x4xf32>
    %20 = vector.broadcast %19 : vector<1x4xf32> to vector<128x4xf32>
    %21 = arith.addf %18, %20 : vector<128x4xf32>
    %cst_17 = arith.constant 0.000000e+00 : f32
    %22 = vector.broadcast %cst_17 : f32 to vector<128x4xf32>
    %23 = arith.maximumf %21, %22 : vector<128x4xf32>
    %24 = arith.truncf %23 : vector<128x4xf32> to vector<128x4xbf16>
    %c0_18 = arith.constant 0 : index
    %c0_19 = arith.constant 0 : index
    %25 = vector.load %arg8[%c0_18, %c0_19] : memref<4x8xbf16, #tpu.memory_space<vmem>>, vector<4x8xbf16>
    %cst_20 = arith.constant dense<0.000000e+00> : vector<128x8xf32>
    %26 = tpu.matmul %24, %25, %cst_20 {dimension_numbers = #tpu.dot_dimension_numbers<[1], [0], [0], [1], [0, 0, 1, 1], [], []>} : vector<128x4xbf16>, vector<4x8xbf16>, vector<128x8xf32> -> vector<128x8xf32>
    %c0_21 = arith.constant 0 : index
    %c0_22 = arith.constant 0 : index
    %27 = vector.load %arg9[%c0_21, %c0_22] : memref<1x8xf32, #tpu.memory_space<vmem>>, vector<1x8xf32>
    %28 = vector.broadcast %27 : vector<1x8xf32> to vector<128x8xf32>
    %29 = arith.addf %26, %28 : vector<128x8xf32>
    %cst_23 = arith.constant dense<0xFF800000> : vector<128xf32>
    %30 = vector.multi_reduction <maximumf>, %29, %cst_23 [1] : vector<128x8xf32> to vector<128xf32>
    %31 = vector.shape_cast %30 : vector<128xf32> to vector<128x1xf32>
    %32 = vector.broadcast %31 : vector<128x1xf32> to vector<128x8xf32>
    %33 = arith.subf %29, %32 : vector<128x8xf32>
    %34 = math.exp %33 : vector<128x8xf32>
    %cst_24 = arith.constant dense<0.000000e+00> : vector<128xf32>
    %35 = vector.multi_reduction <add>, %34, %cst_24 [1] : vector<128x8xf32> to vector<128xf32>
    %36 = vector.shape_cast %35 : vector<128xf32> to vector<128x1xf32>
    %37 = tpu.reciprocal %36 {approx = true} : vector<128x1xf32> -> vector<128x1xf32>
    %38 = arith.mulf %36, %37 : vector<128x1xf32>
    %cst_25 = arith.constant 2.000000e+00 : f32
    %39 = vector.broadcast %cst_25 : f32 to vector<128x1xf32>
    %40 = arith.subf %39, %38 : vector<128x1xf32>
    %41 = arith.mulf %37, %40 : vector<128x1xf32>
    %42 = vector.broadcast %41 : vector<128x1xf32> to vector<128x8xf32>
    %43 = arith.mulf %34, %42 : vector<128x8xf32>
    %c0_26 = arith.constant 0 : index
    %c0_27 = arith.constant 0 : index
    %44 = vector.load %arg10[%c0_26, %c0_27] : memref<128x8xf32, #tpu.memory_space<vmem>>, vector<128x8xf32>
    tpu.vector_store %arg10[%c0_26, %c0_27], %43 {strides = array<i32>} : memref<128x8xf32, #tpu.memory_space<vmem>>, vector<128x8xf32>,
    return
  }
  func.func @transform_0(%arg0: i32) -> (i32, i32) {
    %c0_i32 = arith.constant 0 : i32
    %c0_i32_0 = arith.constant 0 : i32
    return %arg0, %c0_i32 : i32, i32
  }
  func.func @transform_1(%arg0: i32) -> (i32, i32) {
    %c0_i32 = arith.constant 0 : i32
    %c0_i32_0 = arith.constant 0 : i32
    %c0_i32_1 = arith.constant 0 : i32
    return %c0_i32, %c0_i32_0 : i32, i32
  }
  func.func @transform_2(%arg0: i32) -> (i32, i32) {
    %c0_i32 = arith.constant 0 : i32
    %c0_i32_0 = arith.constant 0 : i32
    %c0_i32_1 = arith.constant 0 : i32
    return %c0_i32, %c0_i32_0 : i32, i32
  }
  func.func @transform_3(%arg0: i32) -> (i32, i32) {
    %c0_i32 = arith.constant 0 : i32
    %c0_i32_0 = arith.constant 0 : i32
    %c0_i32_1 = arith.constant 0 : i32
    return %c0_i32, %c0_i32_0 : i32, i32
  }
  func.func @transform_4(%arg0: i32) -> (i32, i32) {
    %c0_i32 = arith.constant 0 : i32
    %c0_i32_0 = arith.constant 0 : i32
    %c0_i32_1 = arith.constant 0 : i32
    return %c0_i32, %c0_i32_0 : i32, i32
  }
  func.func @transform_5(%arg0: i32) -> (i32, i32) {
    %c0_i32 = arith.constant 0 : i32
    %c0_i32_0 = arith.constant 0 : i32
    %c0_i32_1 = arith.constant 0 : i32
    return %c0_i32, %c0_i32_0 : i32, i32
  }
  func.func @transform_6(%arg0: i32) -> (i32, i32) {
    %c0_i32 = arith.constant 0 : i32
    %c0_i32_0 = arith.constant 0 : i32
    %c0_i32_1 = arith.constant 0 : i32
    return %c0_i32, %c0_i32_0 : i32, i32
  }
  func.func @transform_7(%arg0: i32) -> (i32, i32) {
    %c0_i32 = arith.constant 0 : i32
    %c0_i32_0 = arith.constant 0 : i32
    %c0_i32_1 = arith.constant 0 : i32
    return %c0_i32, %c0_i32_0 : i32, i32
  }
  func.func @transform_8(%arg0: i32) -> (i32, i32) {
    %c0_i32 = arith.constant 0 : i32
    %c0_i32_0 = arith.constant 0 : i32
    %c0_i32_1 = arith.constant 0 : i32
    return %c0_i32, %c0_i32_0 : i32, i32
  }
  func.func @transform_9(%arg0: i32) -> (i32, i32) {
    %c0_i32 = arith.constant 0 : i32
    %c0_i32_0 = arith.constant 0 : i32
    return %arg0, %c0_i32 : i32, i32
  }
}

</mosaic_0001>

<llo_original>
// kernel: classifier_forward.1
$region0: #{classifier_forward.1}
  #allocation0 [shape = 'u32[]', space=smem, size = 0x4, offset = 0x4, fixed_abs, tag = 'smem constant byte address 0x4 - core index']
  #allocation1 [shape = 'u32[144,128]{1,0:T(1,128)}', space=vmem, size = 0x12000, scoped, tag = 'internal scratch']
  %s0 = inlined_call_operand.vmem [shape: bf16[256,32], index: 0, kind: input, shape index: {}]
  %s1 = inlined_call_operand.vmem [shape: bf16[32,16], index: 1, kind: input, shape index: {}]
  %s2 = inlined_call_operand.vmem [shape: f32[1,16], index: 2, kind: input, shape index: {}]
  %s3 = inlined_call_operand.vmem [shape: bf16[16,8], index: 3, kind: input, shape index: {}]
  %s4 = inlined_call_operand.vmem [shape: f32[1,8], index: 4, kind: input, shape index: {}]
  %s5 = inlined_call_operand.vmem [shape: bf16[8,4], index: 5, kind: input, shape index: {}]
  %s6 = inlined_call_operand.vmem [shape: f32[1,4], index: 6, kind: input, shape index: {}]
  %s7 = inlined_call_operand.vmem [shape: bf16[4,8], index: 7, kind: input, shape index: {}]
  %s8 = inlined_call_operand.vmem [shape: f32[1,8], index: 8, kind: input, shape index: {}]
  %s9 = inlined_call_operand.vmem [shape: f32[256,8], index: 9, kind: output, shape index: {}]
  %s10 = sld [smem:[#allocation0]]
  $region69: #{classifier_forward.1} parent=0
    _
  %s12 = ssub.s32 1, %s10
  %s13 = scalar_select 0, %s12, %s10
  loop: start=0, step=1, limit=4
  $region2: #{classifier_forward.1} parent=0 // loop_pre_header
    _
  $region3: #{classifier_forward.1} parent=0 // loop_header
    %s15 = sphi 0, %s19
    %p16 = scmp.ge.s32.totalorder %s15, 4
    %s25 = sphi 0, %s27
    %s28 = sphi 0, %s25
    %s29 = sphi 0, %s28
    %s45 = sphi 0, %s29
    %s49 = sphi 0, %s49
    %s51 = sphi 0, %s49
    %s52 = sphi 0, %s51
    %s66 = sphi 0, %s52
    %s70 = sphi 0, %s70
    %s72 = sphi 0, %s70
    %s73 = sphi 0, %s72
    %s87 = sphi 0, %s73
    %s91 = sphi 0, %s91
    %s93 = sphi 0, %s91
    %s94 = sphi 0, %s93
    %s108 = sphi 0, %s94
    %s112 = sphi 0, %s112
    %s114 = sphi 0, %s112
    %s115 = sphi 0, %s114
    %s129 = sphi 0, %s115
    %s133 = sphi 0, %s133
    %s135 = sphi 0, %s133
    %s136 = sphi 0, %s135
    %s150 = sphi 0, %s136
    %s154 = sphi 0, %s154
    %s156 = sphi 0, %s154
    %s157 = sphi 0, %s156
    %s171 = sphi 0, %s157
    %s175 = sphi 0, %s175
    %s177 = sphi 0, %s175
    %s178 = sphi 0, %s177
    %s192 = sphi 0, %s178
    %s196 = sphi 0, %s196
    %s198 = sphi 0, %s196
    %s199 = sphi 0, %s198
    %s213 = sphi 0, %s199
    %s219 = sphi 0, %s221
    %s222 = sphi 0, %s219
    %s223 = sphi 0, %s222
    %s239 = sphi 0, %s223
  $region4: #{classifier_forward.1} parent=0 // loop_header_branch
    %18 = sbr.rel (%p16) target = $region8
  $region5: #{classifier_forward.1} parent=0 // loop_body
    %s20 = ssub.s32 %s15, 1
    %s21 = ssub.s32 %s15, 2
    %s22 = sadd.s32 %s15, 1
    %s23 = ssub.s32 %s15, %s22
    %p24 = scmp.eq.s32.totalorder %s23, 0
    %s26 = sadd.s32 %s25, 1
    %s27 = scalar_select %p24, %s25, %s26
    %p30 = pneg %p24
    %p31 = scmp.eq.s32.totalorder %s15, 1
    %p32 = por %p30, %p31
    %p33 = scmp.ne.s32.totalorder %s25, %s28
    %p34 = scmp.eq.s32.totalorder %s15, 0
    %p35 = por %p33, %p34
    %p36 = scmp.ne.s32.totalorder %s25, %s28
    %p37 = scmp.eq.s32.totalorder %s20, 1
    %p38 = por %p36, %p37
    %p39 = scmp.ne.s32.totalorder %s28, %s29
    %p40 = scmp.eq.s32.totalorder %s20, 0
    %p41 = por %p39, %p40
    %p42 = scmp.ne.s32.totalorder %s28, %s29
    %p43 = scmp.eq.s32.totalorder %s21, 1
    %p44 = por %p42, %p43
    %p46 = scmp.ne.s32.totalorder %s29, %s45
    %p47 = scmp.eq.s32.totalorder %s21, 0
    %p48 = por %p46, %p47
    %s50 = sadd.s32 %s49, 1
    %p53 = scmp.eq.s32.totalorder %s15, 1
    %p54 = scmp.ne.s32.totalorder %s49, %s51
    %p55 = scmp.eq.s32.totalorder %s15, 0
    %p56 = por %p54, %p55
    %p57 = scmp.ne.s32.totalorder %s49, %s51
    %p58 = scmp.eq.s32.totalorder %s20, 1
    %p59 = por %p57, %p58
    %p60 = scmp.ne.s32.totalorder %s51, %s52
    %p61 = scmp.eq.s32.totalorder %s20, 0
    %p62 = por %p60, %p61
    %p63 = scmp.ne.s32.totalorder %s51, %s52
    %p64 = scmp.eq.s32.totalorder %s21, 1
    %p65 = por %p63, %p64
    %p67 = scmp.ne.s32.totalorder %s52, %s66
    %p68 = scmp.eq.s32.totalorder %s21, 0
    %p69 = por %p67, %p68
    %s71 = sadd.s32 %s70, 1
    %p74 = scmp.eq.s32.totalorder %s15, 1
    %p75 = scmp.ne.s32.totalorder %s70, %s72
    %p76 = scmp.eq.s32.totalorder %s15, 0
    %p77 = por %p75, %p76
    %p78 = scmp.ne.s32.totalorder %s70, %s72
    %p79 = scmp.eq.s32.totalorder %s20, 1
    %p80 = por %p78, %p79
    %p81 = scmp.ne.s32.totalorder %s72, %s73
    %p82 = scmp.eq.s32.totalorder %s20, 0
    %p83 = por %p81, %p82
    %p84 = scmp.ne.s32.totalorder %s72, %s73
    %p85 = scmp.eq.s32.totalorder %s21, 1
    %p86 = por %p84, %p85
    %p88 = scmp.ne.s32.totalorder %s73, %s87
    %p89 = scmp.eq.s32.totalorder %s21, 0
    %p90 = por %p88, %p89
    %s92 = sadd.s32 %s91, 1
    %p95 = scmp.eq.s32.totalorder %s15, 1
    %p96 = scmp.ne.s32.totalorder %s91, %s93
    %p97 = scmp.eq.s32.totalorder %s15, 0
    %p98 = por %p96, %p97
    %p99 = scmp.ne.s32.totalorder %s91, %s93
    %p100 = scmp.eq.s32.totalorder %s20, 1
    %p101 = por %p99, %p100
    %p102 = scmp.ne.s32.totalorder %s93, %s94
    %p103 = scmp.eq.s32.totalorder %s20, 0
    %p104 = por %p102, %p103
    %p105 = scmp.ne.s32.totalorder %s93, %s94
    %p106 = scmp.eq.s32.totalorder %s21, 1
    %p107 = por %p105, %p106
    %p109 = scmp.ne.s32.totalorder %s94, %s108
    %p110 = scmp.eq.s32.totalorder %s21, 0
    %p111 = por %p109, %p110
    %s113 = sadd.s32 %s112, 1
    %p116 = scmp.eq.s32.totalorder %s15, 1
    %p117 = scmp.ne.s32.totalorder %s112, %s114
    %p118 = scmp.eq.s32.totalorder %s15, 0
    %p119 = por %p117, %p118
    %p120 = scmp.ne.s32.totalorder %s112, %s114
    %p121 = scmp.eq.s32.totalorder %s20, 1
    %p122 = por %p120, %p121
    %p123 = scmp.ne.s32.totalorder %s114, %s115
    %p124 = scmp.eq.s32.totalorder %s20, 0
    %p125 = por %p123, %p124
    %p126 = scmp.ne.s32.totalorder %s114, %s115
    %p127 = scmp.eq.s32.totalorder %s21, 1
    %p128 = por %p126, %p127
    %p130 = scmp.ne.s32.totalorder %s115, %s129
    %p131 = scmp.eq.s32.totalorder %s21, 0
    %p132 = por %p130, %p131
    %s134 = sadd.s32 %s133, 1
    %p137 = scmp.eq.s32.totalorder %s15, 1
    %p138 = scmp.ne.s32.totalorder %s133, %s135
    %p139 = scmp.eq.s32.totalorder %s15, 0
    %p140 = por %p138, %p139
    %p141 = scmp.ne.s32.totalorder %s133, %s135
    %p142 = scmp.eq.s32.totalorder %s20, 1
    %p143 = por %p141, %p142
    %p144 = scmp.ne.s32.totalorder %s135, %s136
    %p145 = scmp.eq.s32.totalorder %s20, 0
    %p146 = por %p144, %p145
    %p147 = scmp.ne.s32.totalorder %s135, %s136
    %p148 = scmp.eq.s32.totalorder %s21, 1
    %p149 = por %p147, %p148
    %p151 = scmp.ne.s32.totalorder %s136, %s150
    %p152 = scmp.eq.s32.totalorder %s21, 0
    %p153 = por %p151, %p152
    %s155 = sadd.s32 %s154, 1
    %p158 = scmp.eq.s32.totalorder %s15, 1
    %p159 = scmp.ne.s32.totalorder %s154, %s156
    %p160 = scmp.eq.s32.totalorder %s15, 0
    %p161 = por %p159, %p160
    %p162 = scmp.ne.s32.totalorder %s154, %s156
    %p163 = scmp.eq.s32.totalorder %s20, 1
    %p164 = por %p162, %p163
    %p165 = scmp.ne.s32.totalorder %s156, %s157
    %p166 = scmp.eq.s32.totalorder %s20, 0
    %p167 = por %p165, %p166
    %p168 = scmp.ne.s32.totalorder %s156, %s157
    %p169 = scmp.eq.s32.totalorder %s21, 1
    %p170 = por %p168, %p169
    %p172 = scmp.ne.s32.totalorder %s157, %s171
    %p173 = scmp.eq.s32.totalorder %s21, 0
    %p174 = por %p172, %p173
    %s176 = sadd.s32 %s175, 1
    %p179 = scmp.eq.s32.totalorder %s15, 1
    %p180 = scmp.ne.s32.totalorder %s175, %s177
    %p181 = scmp.eq.s32.totalorder %s15, 0
    %p182 = por %p180, %p181
    %p183 = scmp.ne.s32.totalorder %s175, %s177
    %p184 = scmp.eq.s32.totalorder %s20, 1
    %p185 = por %p183, %p184
    %p186 = scmp.ne.s32.totalorder %s177, %s178
    %p187 = scmp.eq.s32.totalorder %s20, 0
    %p188 = por %p186, %p187
    %p189 = scmp.ne.s32.totalorder %s177, %s178
    %p190 = scmp.eq.s32.totalorder %s21, 1
    %p191 = por %p189, %p190
    %p193 = scmp.ne.s32.totalorder %s178, %s192
    %p194 = scmp.eq.s32.totalorder %s21, 0
    %p195 = por %p193, %p194
    %s197 = sadd.s32 %s196, 1
    %p200 = scmp.eq.s32.totalorder %s15, 1
    %p201 = scmp.ne.s32.totalorder %s196, %s198
    %p202 = scmp.eq.s32.totalorder %s15, 0
    %p203 = por %p201, %p202
    %p204 = scmp.ne.s32.totalorder %s196, %s198
    %p205 = scmp.eq.s32.totalorder %s20, 1
    %p206 = por %p204, %p205
    %p207 = scmp.ne.s32.totalorder %s198, %s199
    %p208 = scmp.eq.s32.totalorder %s20, 0
    %p209 = por %p207, %p208
    %p210 = scmp.ne.s32.totalorder %s198, %s199
    %p211 = scmp.eq.s32.totalorder %s21, 1
    %p212 = por %p210, %p211
    %p214 = scmp.ne.s32.totalorder %s199, %s213
    %p215 = scmp.eq.s32.totalorder %s21, 0
    %p216 = por %p214, %p215
    %s217 = ssub.s32 %s15, %s22
    %p218 = scmp.eq.s32.totalorder %s217, 0
    %s220 = sadd.s32 %s219, 1
    %s221 = scalar_select %p218, %s219, %s220
    %p224 = pneg %p218
    %p225 = scmp.eq.s32.totalorder %s15, 1
    %p226 = por %p224, %p225
    %p227 = scmp.ne.s32.totalorder %s219, %s222
    %p228 = scmp.eq.s32.totalorder %s15, 0
    %p229 = por %p227, %p228
    %p230 = scmp.ne.s32.totalorder %s219, %s222
    %p231 = scmp.eq.s32.totalorder %s20, 1
    %p232 = por %p230, %p231
    %p233 = scmp.ne.s32.totalorder %s222, %s223
    %p234 = scmp.eq.s32.totalorder %s20, 0
    %p235 = por %p233, %p234
    %p236 = scmp.ne.s32.totalorder %s222, %s223
    %p237 = scmp.eq.s32.totalorder %s21, 1
    %p238 = por %p236, %p237
    %p240 = scmp.ne.s32.totalorder %s223, %s239
    %p241 = scmp.eq.s32.totalorder %s21, 0
    %p242 = por %p240, %p241
    %p243 = scmp.le.s32.totalorder 1, %s15
    %p244 = scmp.lt.s32.totalorder %s15, 3
    %p245 = pnand %p243, %p244
    %p246 = pneg %p245
    // Predicated region
    $region9: #{classifier_forward.1} parent=5 // pred_check
      _
    $region10: #{classifier_forward.1} parent=5 // pred_check_branch
      %248 = sbr.rel (%p245) target = $region12
    $region11: #{classifier_forward.1} parent=5 // pred_region
      %s249 = ssub.s32 %s15, 1
      // Predicated region
      $region13: #{classifier_forward.1} parent=11 // pred_check
        %p250 = pneg %p62
      $region14: #{classifier_forward.1} parent=11 // pred_check_branch
        %252 = sbr.rel (%p250) target = $region16
      $region15: #{classifier_forward.1} parent=11 // pred_region
        _
      $region16: #{classifier_forward.1} parent=11 // pred_fallthru
        _
      // Predicated region
      $region17: #{classifier_forward.1} parent=11 // pred_check
        %p253 = pneg %p83
      $region18: #{classifier_forward.1} parent=11 // pred_check_branch
        %255 = sbr.rel (%p253) target = $region20
      $region19: #{classifier_forward.1} parent=11 // pred_region
        _
      $region20: #{classifier_forward.1} parent=11 // pred_fallthru
        _
      // Predicated region
      $region21: #{classifier_forward.1} parent=11 // pred_check
        %p256 = pneg %p104
      $region22: #{classifier_forward.1} parent=11 // pred_check_branch
        %258 = sbr.rel (%p256) target = $region24
      $region23: #{classifier_forward.1} parent=11 // pred_region
        _
      $region24: #{classifier_forward.1} parent=11 // pred_fallthru
        _
      // Predicated region
      $region25: #{classifier_forward.1} parent=11 // pred_check
        %p259 = pneg %p125
      $region26: #{classifier_forward.1} parent=11 // pred_check_branch
        %261 = sbr.rel (%p259) target = $region28
      $region27: #{classifier_forward.1} parent=11 // pred_region
        _
      $region28: #{classifier_forward.1} parent=11 // pred_fallthru
        _
      // Predicated region
      $region29: #{classifier_forward.1} parent=11 // pred_check
        %p262 = pneg %p146
      $region30: #{classifier_forward.1} parent=11 // pred_check_branch
        %264 = sbr.rel (%p262) target = $region32
      $region31: #{classifier_forward.1} parent=11 // pred_region
        _
      $region32: #{classifier_forward.1} parent=11 // pred_fallthru
        _
      // Predicated region
      $region33: #{classifier_forward.1} parent=11 // pred_check
        %p265 = pneg %p167
      $region34: #{classifier_forward.1} parent=11 // pred_check_branch
        %267 = sbr.rel (%p265) target = $region36
      $region35: #{classifier_forward.1} parent=11 // pred_region
        _
      $region36: #{classifier_forward.1} parent=11 // pred_fallthru
        _
      // Predicated region
      $region37: #{classifier_forward.1} parent=11 // pred_check
        %p268 = pneg %p188
      $region38: #{classifier_forward.1} parent=11 // pred_check_branch
        %270 = sbr.rel (%p268) target = $region40
      $region39: #{classifier_forward.1} parent=11 // pred_region
        _
      $region40: #{classifier_forward.1} parent=11 // pred_fallthru
        _
      // Predicated region
      $region41: #{classifier_forward.1} parent=11 // pred_check
        %p271 = pneg %p209
      $region42: #{classifier_forward.1} parent=11 // pred_check_branch
        %273 = sbr.rel (%p271) target = $region44
      $region43: #{classifier_forward.1} parent=11 // pred_region
        _
      $region44: #{classifier_forward.1} parent=11 // pred_fallthru
        _
    $region12: #{classifier_forward.1} parent=5 // pred_fallthru
      _
    %p274 = scmp.lt.s32.totalorder %s15, 2
    // Predicated region
    $region45: #{classifier_forward.1} parent=5 // pred_check
      %p275 = pneg %p274
    $region46: #{classifier_forward.1} parent=5 // pred_check_branch
      %277 = sbr.rel (%p275) target = $region48
    $region47: #{classifier_forward.1} parent=5 // pred_region
      // Predicated region
      $region49: #{classifier_forward.1} parent=47 // pred_check
        %p278 = pneg %p35
      $region50: #{classifier_forward.1} parent=47 // pred_check_branch
        %280 = sbr.rel (%p278) target = $region52
      $region51: #{classifier_forward.1} parent=47 // pred_region
        %s281 = smul.u32 16, %s15
        %p282 = scmp.lt.s32.totalorder %s281, 31
        %s283 = scalar_select %p282, %s281, 31
        %s284 = smul.addr %s283, 4
        %s285 = scalar_lea.vmem %s0, %s284
        %s286 = smul.u32 16, %s15
      $region52: #{classifier_forward.1} parent=47 // pred_fallthru
        _
    $region48: #{classifier_forward.1} parent=5 // pred_fallthru
      _
    %p287 = scmp.le.s32.totalorder 1, %s15
    %p288 = scmp.lt.s32.totalorder %s15, 3
    %p289 = pnand %p287, %p288
    %p290 = pneg %p289
    // Predicated region
    $region53: #{classifier_forward.1} parent=5 // pred_check
      _
    $region54: #{classifier_forward.1} parent=5 // pred_check_branch
      %292 = sbr.rel (%p289) target = $region56
    $region55: #{classifier_forward.1} parent=5 // pred_region
      %s293 = ssub.s32 %s15, 1
      %s294 = smul.u32 16, %s20
      %p295 = scmp.lt.s32.totalorder %s294, 31
      %s296 = scalar_select %p295, %s294, 31
      %s297 = smul.addr %s296, 4
      %s298 = scalar_lea.vmem %s0, %s297
      %p299 = pneg %p41
      %p300 = pneg %p38
      %p301 = pneg %p62
      %p302 = pneg %p59
      %p303 = pneg %p83
      %p304 = pneg %p80
      %p305 = pneg %p104
      %p306 = pneg %p101
      %p307 = pneg %p125
      %p308 = pneg %p122
      %p309 = pneg %p146
      %p310 = pneg %p143
      %p311 = pneg %p167
      %p312 = pneg %p164
      %p313 = pneg %p188
      %p314 = pneg %p185
      %p315 = pneg %p209
      %p316 = pneg %p206
      %p317 = pneg %p235
      %p318 = pneg %p232
      %s319 = smul.u32 16, %s20
      %p320 = scmp.lt.s32.totalorder %s319, 31
      %s321 = scalar_select %p320, %s319, 31
      %s322 = smul.addr %s321, 8
      %s323 = scalar_lea.vmem %s9, %s322
      %s324 = smul.u32 16, %s20
      %p325 = scmp.lt.s32.totalorder %s324, 31
      %s326 = scalar_select %p325, %s324, 31
      %s327 = smul.addr %s326, 4
      %s328 = scalar_lea.vmem %s0, %s327
      %s329 = smul.u32 16, %s20
      %s330 = smul.u32 16, %s20
      %p331 = scmp.lt.s32.totalorder %s330, 31
      %s332 = scalar_select %p331, %s330, 31
      %s333 = smul.addr %s332, 8
      %s334 = scalar_lea.vmem %s9, %s333
      %s335 = smul.u32 16, %s20
      %v337 = vld [vmem:[%s328] sm:$0xf]
      %v338 = vld [vmem:[%s328 + $0x4] sm:$0xf]
      %v339 = vld [vmem:[%s328 + $0x8] sm:$0xf]
      %v340 = vld [vmem:[%s328 + $0xc] sm:$0xf]
      %v341 = vld [vmem:[%s328 + $0x10] sm:$0xf]
      %v342 = vld [vmem:[%s328 + $0x14] sm:$0xf]
      %v343 = vld [vmem:[%s328 + $0x18] sm:$0xf]
      %v344 = vld [vmem:[%s328 + $0x1c] sm:$0xf]
      %v345 = vld [vmem:[%s328 + $0x20] sm:$0xf]
      %v346 = vld [vmem:[%s328 + $0x24] sm:$0xf]
      %v347 = vld [vmem:[%s328 + $0x28] sm:$0xf]
      %v348 = vld [vmem:[%s328 + $0x2c] sm:$0xf]
      %v349 = vld [vmem:[%s328 + $0x30] sm:$0xf]
      %v350 = vld [vmem:[%s328 + $0x34] sm:$0xf]
      %v351 = vld [vmem:[%s328 + $0x38] sm:$0xf]
      %v352 = vld [vmem:[%s328 + $0x3c] sm:$0xf]
      %v353 = vld [vmem:[%s1] sm:$0xf]
      %v354 = vld [vmem:[%s1 + $0x4] sm:$0xf]
      %v355 = vld [vmem:[%s1 + $0x8] sm:$0xf]
      %v356 = vld [vmem:[%s1 + $0xc] sm:$0xf]
      %v357 = vld [vmem:[%s2] sm:$0x1]
      %v359 = vlaneseq
      %v360 = vshrl.u32 %v359, 7
      %v361 = vsub.s32 0, %v360
      %v362 = vrot.slane %v357, %v361
      %v380 = vunpack.c.l.b16 %v337
      %v381 = vunpack.c.l.b16 %v338
      %v382 = vunpack.c.l.b16 %v339
      %v383 = vunpack.c.l.b16 %v340
      %v384 = vunpack.c.l.b16 %v341
      %v385 = vunpack.c.l.b16 %v342
      %v386 = vunpack.c.l.b16 %v343
      %v387 = vunpack.c.l.b16 %v344
      %v388 = vunpack.c.l.b16 %v345
      %v389 = vunpack.c.l.b16 %v346
      %v390 = vunpack.c.l.b16 %v347
      %v391 = vunpack.c.l.b16 %v348
      %v392 = vunpack.c.l.b16 %v349
      %v393 = vunpack.c.l.b16 %v350
      %v394 = vunpack.c.l.b16 %v351
      %v395 = vunpack.c.l.b16 %v352
      %v396 = vpack.c.b16 %v381, %v380
      %v397 = vpack.c.b16 %v383, %v382
      %v398 = vpack.c.b16 %v385, %v384
      %v399 = vpack.c.b16 %v387, %v386
      %v400 = vpack.c.b16 %v389, %v388
      %v401 = vpack.c.b16 %v391, %v390
      %v402 = vpack.c.b16 %v393, %v392
      %v403 = vpack.c.b16 %v395, %v394
      %v408 = vunpack.c.l.b16 %v353
      %v409 = vunpack.c.l.b16 %v354
      %v410 = vunpack.c.l.b16 %v355
      %v411 = vunpack.c.l.b16 %v356
      %v412 = vpack.c.b16 %v409, %v408
      %v413 = vpack.c.b16 %v411, %v410
      %vm416 = vcmask 261120
      %v418 = vsel %vm416, %v396, 0
      %v421 = vsel %vm416, %v397, 0
      %v424 = vsel %vm416, %v398, 0
      %v427 = vsel %vm416, %v399, 0
      %v430 = vsel %vm416, %v400, 0
      %v433 = vsel %vm416, %v401, 0
      %v436 = vsel %vm416, %v402, 0
      %v439 = vsel %vm416, %v403, 0
      %441 = vmatprep.subr.bf16.mxu0 0
      %442 = vmatpush1.bf16.msra.mxu0 0
      %443 = vmatprep.subr.bf16.mxu0 0
      %444 = vmatpush1.bf16.msra.mxu0 0
      %445 = vmatprep.subr.bf16.mxu0 0
      %446 = vmatpush1.bf16.msra.mxu0 0
      %447 = vmatprep.subr.bf16.mxu0 0
      %448 = vmatpush1.bf16.msra.mxu0 0
      %449 = vmatprep.subr.bf16.mxu0 0
      %450 = vmatpush1.bf16.msra.mxu0 0
      %451 = vmatprep.subr.bf16.mxu0 0
      %452 = vmatpush1.bf16.msra.mxu0 0
      %453 = vmatprep.subr.bf16.mxu0 0
      %454 = vmatpush1.bf16.msra.mxu0 %v413
      %455 = vmatprep.subr.bf16.mxu0 0
      %456 = vmatpush1.bf16.msra.mxu0 %v412
      %457 = vmatprep.subr.bf16.mxu0 0
      %458 = vmatpush2.bf16.msra.mxu0 0
      %459 = vmatprep.subr.bf16.mxu0 0
      %460 = vmatpush2.bf16.msra.mxu0 0
      %461 = vmatprep.subr.bf16.mxu0 0
      %462 = vmatpush2.bf16.msra.mxu0 0
      %463 = vmatprep.subr.bf16.mxu0 0
      %464 = vmatpush2.bf16.msra.mxu0 0
      %465 = vmatprep.subr.bf16.mxu0 0
      %466 = vmatpush2.bf16.msra.mxu0 0
      %467 = vmatprep.subr.bf16.mxu0 0
      %468 = vmatpush2.bf16.msra.mxu0 0
      %469 = vmatprep.subr.bf16.mxu0 0
      %470 = vmatpush2.bf16.msra.mxu0 0
      %471 = vmatprep.subr.bf16.mxu0 0
      %472 = vmatpush2.bf16.msra.mxu0 0
      %473 = vmatprep.mubr.bf16.mxu0 0
      %474 = vmatmul.mubr.bf16.gmra.mxu0 %v418
      %v475 = vpop.f32.mrf.mxu0
      %v476 = vadd.f32 %v362, %v475
      %v477 = vpop.f32.mrf.mxu0
      %v478 = vpop.f32.mrf.mxu0
      %v479 = vadd.f32 %v362, %v478
      %v480 = vpop.f32.mrf.mxu0
      %481 = vmatprep.mubr.bf16.mxu0 0
      %482 = vmatmul.mubr.bf16.gmra.mxu0 %v421
      %v483 = vpop.f32.mrf.mxu0
      %v484 = vadd.f32 %v362, %v483
      %v485 = vpop.f32.mrf.mxu0
      %v486 = vpop.f32.mrf.mxu0
      %v487 = vadd.f32 %v362, %v486
      %v488 = vpop.f32.mrf.mxu0
      %489 = vmatprep.mubr.bf16.mxu0 0
      %490 = vmatmul.mubr.bf16.gmra.mxu0 %v424
      %v491 = vpop.f32.mrf.mxu0
      %v492 = vadd.f32 %v362, %v491
      %v493 = vpop.f32.mrf.mxu0
      %v494 = vpop.f32.mrf.mxu0
      %v495 = vadd.f32 %v362, %v494
      %v496 = vpop.f32.mrf.mxu0
      %497 = vmatprep.mubr.bf16.mxu0 0
      %498 = vmatmul.mubr.bf16.gmra.mxu0 %v427
      %v499 = vpop.f32.mrf.mxu0
      %v500 = vadd.f32 %v362, %v499
      %v501 = vpop.f32.mrf.mxu0
      %v502 = vpop.f32.mrf.mxu0
      %v503 = vadd.f32 %v362, %v502
      %v504 = vpop.f32.mrf.mxu0
      %505 = vmatprep.mubr.bf16.mxu0 0
      %506 = vmatmul.mubr.bf16.gmra.mxu0 %v430
      %v507 = vpop.f32.mrf.mxu0
      %v508 = vadd.f32 %v362, %v507
      %v509 = vpop.f32.mrf.mxu0
      %v510 = vpop.f32.mrf.mxu0
      %v511 = vadd.f32 %v362, %v510
      %v512 = vpop.f32.mrf.mxu0
      %513 = vmatprep.mubr.bf16.mxu0 0
      %514 = vmatmul.mubr.bf16.gmra.mxu0 %v433
      %v515 = vpop.f32.mrf.mxu0
      %v516 = vadd.f32 %v362, %v515
      %v517 = vpop.f32.mrf.mxu0
      %v518 = vpop.f32.mrf.mxu0
      %v519 = vadd.f32 %v362, %v518
      %v520 = vpop.f32.mrf.mxu0
      %521 = vmatprep.mubr.bf16.mxu0 0
      %522 = vmatmul.mubr.bf16.gmra.mxu0 %v436
      %v523 = vpop.f32.mrf.mxu0
      %v524 = vadd.f32 %v362, %v523
      %v525 = vpop.f32.mrf.mxu0
      %v526 = vpop.f32.mrf.mxu0
      %v527 = vadd.f32 %v362, %v526
      %v528 = vpop.f32.mrf.mxu0
      %529 = vmatprep.mubr.bf16.mxu0 0
      %530 = vmatmul.mubr.bf16.gmra.mxu0 %v439
      %v531 = vpop.f32.mrf.mxu0
      %v532 = vadd.f32 %v362, %v531
      %v533 = vpop.f32.mrf.mxu0
      %v534 = vpop.f32.mrf.mxu0
      %v535 = vadd.f32 %v362, %v534
      %v536 = vpop.f32.mrf.mxu0
      %537 = vdwg.mxu0
      %v538 = vmax.f32 %v476, 0.0
      %v539 = vmax.f32 %v479, 0.0
      %v540 = vmax.f32 %v484, 0.0
      %v541 = vmax.f32 %v487, 0.0
      %v542 = vmax.f32 %v492, 0.0
      %v543 = vmax.f32 %v495, 0.0
      %v544 = vmax.f32 %v500, 0.0
      %v545 = vmax.f32 %v503, 0.0
      %v546 = vmax.f32 %v508, 0.0
      %v547 = vmax.f32 %v511, 0.0
      %v548 = vmax.f32 %v516, 0.0
      %v549 = vmax.f32 %v519, 0.0
      %v550 = vmax.f32 %v524, 0.0
      %v551 = vmax.f32 %v527, 0.0
      %v552 = vmax.f32 %v532, 0.0
      %v553 = vmax.f32 %v535, 0.0
      %v554 = vpack.c.bf16 %v539, %v538
      %v555 = vpack.c.bf16 %v541, %v540
      %v556 = vpack.c.bf16 %v543, %v542
      %v557 = vpack.c.bf16 %v545, %v544
      %v558 = vpack.c.bf16 %v547, %v546
      %v559 = vpack.c.bf16 %v549, %v548
      %v560 = vpack.c.bf16 %v551, %v550
      %v561 = vpack.c.bf16 %v553, %v552
      %v562 = vld [vmem:[%s3] sm:$0xf]
      %v563 = vld [vmem:[%s3 + $0x4] sm:$0xf]
      %v564 = vld [vmem:[%s4] sm:$0x1]
      %v566 = vlaneseq
      %v567 = vshrl.u32 %v566, 7
      %v568 = vsub.s32 0, %v567
      %v569 = vrot.slane %v564, %v568
      %v573 = vunpack.c.l.b16 %v562
      %v574 = vunpack.c.l.b16 %v563
      %v575 = vpack.c.b16 %v574, %v573
      %vm577 = vcmask 130048
      %v579 = vsel %vm577, %v554, 0
      %v582 = vsel %vm577, %v555, 0
      %v585 = vsel %vm577, %v556, 0
      %v588 = vsel %vm577, %v557, 0
      %v591 = vsel %vm577, %v558, 0
      %v594 = vsel %vm577, %v559, 0
      %v597 = vsel %vm577, %v560, 0
      %v600 = vsel %vm577, %v561, 0
      %602 = vmatprep.subr.bf16.mxu0 0
      %603 = vmatpush1.bf16.msra.mxu0 0
      %604 = vmatprep.subr.bf16.mxu0 0
      %605 = vmatpush1.bf16.msra.mxu0 0
      %606 = vmatprep.subr.bf16.mxu0 0
      %607 = vmatpush1.bf16.msra.mxu0 0
      %608 = vmatprep.subr.bf16.mxu0 0
      %609 = vmatpush1.bf16.msra.mxu0 0
      %610 = vmatprep.subr.bf16.mxu0 0
      %611 = vmatpush1.bf16.msra.mxu0 0
      %612 = vmatprep.subr.bf16.mxu0 0
      %613 = vmatpush1.bf16.msra.mxu0 0
      %614 = vmatprep.subr.bf16.mxu0 0
      %615 = vmatpush1.bf16.msra.mxu0 0
      %616 = vmatprep.subr.bf16.mxu0 0
      %617 = vmatpush1.bf16.msra.mxu0 %v575
      %618 = vmatprep.subr.bf16.mxu0 0
      %619 = vmatpush2.bf16.msra.mxu0 0
      %620 = vmatprep.subr.bf16.mxu0 0
      %621 = vmatpush2.bf16.msra.mxu0 0
      %622 = vmatprep.subr.bf16.mxu0 0
      %623 = vmatpush2.bf16.msra.mxu0 0
      %624 = vmatprep.subr.bf16.mxu0 0
      %625 = vmatpush2.bf16.msra.mxu0 0
      %626 = vmatprep.subr.bf16.mxu0 0
      %627 = vmatpush2.bf16.msra.mxu0 0
      %628 = vmatprep.subr.bf16.mxu0 0
      %629 = vmatpush2.bf16.msra.mxu0 0
      %630 = vmatprep.subr.bf16.mxu0 0
      %631 = vmatpush2.bf16.msra.mxu0 0
      %632 = vmatprep.subr.bf16.mxu0 0
      %633 = vmatpush2.bf16.msra.mxu0 0
      %634 = vmatprep.mubr.bf16.mxu0 0
      %635 = vmatmul.mubr.bf16.gmra.mxu0 %v579
      %v636 = vpop.f32.mrf.mxu0
      %v637 = vadd.f32 %v569, %v636
      %v638 = vpop.f32.mrf.mxu0
      %v639 = vpop.f32.mrf.mxu0
      %v640 = vadd.f32 %v569, %v639
      %v641 = vpop.f32.mrf.mxu0
      %642 = vmatprep.mubr.bf16.mxu0 0
      %643 = vmatmul.mubr.bf16.gmra.mxu0 %v582
      %v644 = vpop.f32.mrf.mxu0
      %v645 = vadd.f32 %v569, %v644
      %v646 = vpop.f32.mrf.mxu0
      %v647 = vpop.f32.mrf.mxu0
      %v648 = vadd.f32 %v569, %v647
      %v649 = vpop.f32.mrf.mxu0
      %650 = vmatprep.mubr.bf16.mxu0 0
      %651 = vmatmul.mubr.bf16.gmra.mxu0 %v585
      %v652 = vpop.f32.mrf.mxu0
      %v653 = vadd.f32 %v569, %v652
      %v654 = vpop.f32.mrf.mxu0
      %v655 = vpop.f32.mrf.mxu0
      %v656 = vadd.f32 %v569, %v655
      %v657 = vpop.f32.mrf.mxu0
      %658 = vmatprep.mubr.bf16.mxu0 0
      %659 = vmatmul.mubr.bf16.gmra.mxu0 %v588
      %v660 = vpop.f32.mrf.mxu0
      %v661 = vadd.f32 %v569, %v660
      %v662 = vpop.f32.mrf.mxu0
      %v663 = vpop.f32.mrf.mxu0
      %v664 = vadd.f32 %v569, %v663
      %v665 = vpop.f32.mrf.mxu0
      %666 = vmatprep.mubr.bf16.mxu0 0
      %667 = vmatmul.mubr.bf16.gmra.mxu0 %v591
      %v668 = vpop.f32.mrf.mxu0
      %v669 = vadd.f32 %v569, %v668
      %v670 = vpop.f32.mrf.mxu0
      %v671 = vpop.f32.mrf.mxu0
      %v672 = vadd.f32 %v569, %v671
      %v673 = vpop.f32.mrf.mxu0
      %674 = vmatprep.mubr.bf16.mxu0 0
      %675 = vmatmul.mubr.bf16.gmra.mxu0 %v594
      %v676 = vpop.f32.mrf.mxu0
      %v677 = vadd.f32 %v569, %v676
      %v678 = vpop.f32.mrf.mxu0
      %v679 = vpop.f32.mrf.mxu0
      %v680 = vadd.f32 %v569, %v679
      %v681 = vpop.f32.mrf.mxu0
      %682 = vmatprep.mubr.bf16.mxu0 0
      %683 = vmatmul.mubr.bf16.gmra.mxu0 %v597
      %v684 = vpop.f32.mrf.mxu0
      %v685 = vadd.f32 %v569, %v684
      %v686 = vpop.f32.mrf.mxu0
      %v687 = vpop.f32.mrf.mxu0
      %v688 = vadd.f32 %v569, %v687
      %v689 = vpop.f32.mrf.mxu0
      %690 = vmatprep.mubr.bf16.mxu0 0
      %691 = vmatmul.mubr.bf16.gmra.mxu0 %v600
      %v692 = vpop.f32.mrf.mxu0
      %v693 = vadd.f32 %v569, %v692
      %v694 = vpop.f32.mrf.mxu0
      %v695 = vpop.f32.mrf.mxu0
      %v696 = vadd.f32 %v569, %v695
      %v697 = vpop.f32.mrf.mxu0
      %698 = vdwg.mxu0
      %v699 = vmax.f32 %v637, 0.0
      %v700 = vmax.f32 %v640, 0.0
      %v701 = vmax.f32 %v645, 0.0
      %v702 = vmax.f32 %v648, 0.0
      %v703 = vmax.f32 %v653, 0.0
      %v704 = vmax.f32 %v656, 0.0
      %v705 = vmax.f32 %v661, 0.0
      %v706 = vmax.f32 %v664, 0.0
      %v707 = vmax.f32 %v669, 0.0
      %v708 = vmax.f32 %v672, 0.0
      %v709 = vmax.f32 %v677, 0.0
      %v710 = vmax.f32 %v680, 0.0
      %v711 = vmax.f32 %v685, 0.0
      %v712 = vmax.f32 %v688, 0.0
      %v713 = vmax.f32 %v693, 0.0
      %v714 = vmax.f32 %v696, 0.0
      %v715 = vpack.c.bf16 %v700, %v699
      %v716 = vpack.c.bf16 %v702, %v701
      %v717 = vpack.c.bf16 %v704, %v703
      %v718 = vpack.c.bf16 %v706, %v705
      %v719 = vpack.c.bf16 %v708, %v707
      %v720 = vpack.c.bf16 %v710, %v709
      %v721 = vpack.c.bf16 %v712, %v711
      %v722 = vpack.c.bf16 %v714, %v713
      %v723 = vld [vmem:[%s5] sm:$0xf]
      %v724 = vld [vmem:[%s6] sm:$0x1]
      %v726 = vlaneseq
      %v727 = vshrl.u32 %v726, 7
      %v728 = vsub.s32 0, %v727
      %v729 = vrot.slane %v724, %v728
      %vm731 = vcmask 64512
      %v733 = vsel %vm731, %v715, 0
      %v736 = vsel %vm731, %v716, 0
      %v739 = vsel %vm731, %v717, 0
      %v742 = vsel %vm731, %v718, 0
      %v745 = vsel %vm731, %v719, 0
      %v748 = vsel %vm731, %v720, 0
      %v751 = vsel %vm731, %v721, 0
      %v754 = vsel %vm731, %v722, 0
      %vm756 = vcmask 1043456
      %v758 = vsel %vm756, %v723, 0
      %760 = vmatprep.subr.bf16.mxu0 0
      %761 = vmatpush1.bf16.msra.mxu0 0
      %762 = vmatprep.subr.bf16.mxu0 0
      %763 = vmatpush1.bf16.msra.mxu0 0
      %764 = vmatprep.subr.bf16.mxu0 0
      %765 = vmatpush1.bf16.msra.mxu0 0
      %766 = vmatprep.subr.bf16.mxu0 0
      %767 = vmatpush1.bf16.msra.mxu0 0
      %768 = vmatprep.subr.bf16.mxu0 0
      %769 = vmatpush1.bf16.msra.mxu0 0
      %770 = vmatprep.subr.bf16.mxu0 0
      %771 = vmatpush1.bf16.msra.mxu0 0
      %772 = vmatprep.subr.bf16.mxu0 0
      %773 = vmatpush1.bf16.msra.mxu0 0
      %774 = vmatprep.subr.bf16.mxu0 0
      %775 = vmatpush1.bf16.msra.mxu0 %v758
      %776 = vmatprep.subr.bf16.mxu0 0
      %777 = vmatpush2.bf16.msra.mxu0 0
      %778 = vmatprep.subr.bf16.mxu0 0
      %779 = vmatpush2.bf16.msra.mxu0 0
      %780 = vmatprep.subr.bf16.mxu0 0
      %781 = vmatpush2.bf16.msra.mxu0 0
      %782 = vmatprep.subr.bf16.mxu0 0
      %783 = vmatpush2.bf16.msra.mxu0 0
      %784 = vmatprep.subr.bf16.mxu0 0
      %785 = vmatpush2.bf16.msra.mxu0 0
      %786 = vmatprep.subr.bf16.mxu0 0
      %787 = vmatpush2.bf16.msra.mxu0 0
      %788 = vmatprep.subr.bf16.mxu0 0
      %789 = vmatpush2.bf16.msra.mxu0 0
      %790 = vmatprep.subr.bf16.mxu0 0
      %791 = vmatpush2.bf16.msra.mxu0 0
      %792 = vmatprep.mubr.bf16.mxu0 0
      %793 = vmatmul.mubr.bf16.gmra.mxu0 %v733
      %v794 = vpop.f32.mrf.mxu0
      %v795 = vadd.f32 %v729, %v794
      %v796 = vpop.f32.mrf.mxu0
      %v797 = vpop.f32.mrf.mxu0
      %v798 = vadd.f32 %v729, %v797
      %v799 = vpop.f32.mrf.mxu0
      %800 = vmatprep.mubr.bf16.mxu0 0
      %801 = vmatmul.mubr.bf16.gmra.mxu0 %v736
      %v802 = vpop.f32.mrf.mxu0
      %v803 = vadd.f32 %v729, %v802
      %v804 = vpop.f32.mrf.mxu0
      %v805 = vpop.f32.mrf.mxu0
      %v806 = vadd.f32 %v729, %v805
      %v807 = vpop.f32.mrf.mxu0
      %808 = vmatprep.mubr.bf16.mxu0 0
      %809 = vmatmul.mubr.bf16.gmra.mxu0 %v739
      %v810 = vpop.f32.mrf.mxu0
      %v811 = vadd.f32 %v729, %v810
      %v812 = vpop.f32.mrf.mxu0
      %v813 = vpop.f32.mrf.mxu0
      %v814 = vadd.f32 %v729, %v813
      %v815 = vpop.f32.mrf.mxu0
      %816 = vmatprep.mubr.bf16.mxu0 0
      %817 = vmatmul.mubr.bf16.gmra.mxu0 %v742
      %v818 = vpop.f32.mrf.mxu0
      %v819 = vadd.f32 %v729, %v818
      %v820 = vpop.f32.mrf.mxu0
      %v821 = vpop.f32.mrf.mxu0
      %v822 = vadd.f32 %v729, %v821
      %v823 = vpop.f32.mrf.mxu0
      %824 = vmatprep.mubr.bf16.mxu0 0
      %825 = vmatmul.mubr.bf16.gmra.mxu0 %v745
      %v826 = vpop.f32.mrf.mxu0
      %v827 = vadd.f32 %v729, %v826
      %v828 = vpop.f32.mrf.mxu0
      %v829 = vpop.f32.mrf.mxu0
      %v830 = vadd.f32 %v729, %v829
      %v831 = vpop.f32.mrf.mxu0
      %832 = vmatprep.mubr.bf16.mxu0 0
      %833 = vmatmul.mubr.bf16.gmra.mxu0 %v748
      %v834 = vpop.f32.mrf.mxu0
      %v835 = vadd.f32 %v729, %v834
      %v836 = vpop.f32.mrf.mxu0
      %v837 = vpop.f32.mrf.mxu0
      %v838 = vadd.f32 %v729, %v837
      %v839 = vpop.f32.mrf.mxu0
      %840 = vmatprep.mubr.bf16.mxu0 0
      %841 = vmatmul.mubr.bf16.gmra.mxu0 %v751
      %v842 = vpop.f32.mrf.mxu0
      %v843 = vadd.f32 %v729, %v842
      %v844 = vpop.f32.mrf.mxu0
      %v845 = vpop.f32.mrf.mxu0
      %v846 = vadd.f32 %v729, %v845
      %v847 = vpop.f32.mrf.mxu0
      %848 = vmatprep.mubr.bf16.mxu0 0
      %849 = vmatmul.mubr.bf16.gmra.mxu0 %v754
      %v850 = vpop.f32.mrf.mxu0
      %v851 = vadd.f32 %v729, %v850
      %v852 = vpop.f32.mrf.mxu0
      %v853 = vpop.f32.mrf.mxu0
      %v854 = vadd.f32 %v729, %v853
      %v855 = vpop.f32.mrf.mxu0
      %856 = vdwg.mxu0
      %v857 = vmax.f32 %v795, 0.0
      %v858 = vmax.f32 %v798, 0.0
      %v859 = vmax.f32 %v803, 0.0
      %v860 = vmax.f32 %v806, 0.0
      %v861 = vmax.f32 %v811, 0.0
      %v862 = vmax.f32 %v814, 0.0
      %v863 = vmax.f32 %v819, 0.0
      %v864 = vmax.f32 %v822, 0.0
      %v865 = vmax.f32 %v827, 0.0
      %v866 = vmax.f32 %v830, 0.0
      %v867 = vmax.f32 %v835, 0.0
      %v868 = vmax.f32 %v838, 0.0
      %v869 = vmax.f32 %v843, 0.0
      %v870 = vmax.f32 %v846, 0.0
      %v871 = vmax.f32 %v851, 0.0
      %v872 = vmax.f32 %v854, 0.0
      %v873 = vpack.c.bf16 %v858, %v857
      %v874 = vpack.c.bf16 %v860, %v859
      %v875 = vpack.c.bf16 %v862, %v861
      %v876 = vpack.c.bf16 %v864, %v863
      %v877 = vpack.c.bf16 %v866, %v865
      %v878 = vpack.c.bf16 %v868, %v867
      %v879 = vpack.c.bf16 %v870, %v869
      %v880 = vpack.c.bf16 %v872, %v871
      %v881 = vld [vmem:[%s7] sm:$0x3]
      %v882 = vld [vmem:[%s8] sm:$0x1]
      %v884 = vlaneseq
      %v885 = vshrl.u32 %v884, 7
      %v886 = vsub.s32 0, %v885
      %v887 = vrot.slane %v882, %v886
      %vm889 = vcmask 31744
      %v891 = vsel %vm889, %v873, 0
      %v894 = vsel %vm889, %v874, 0
      %v897 = vsel %vm889, %v875, 0
      %v900 = vsel %vm889, %v876, 0
      %v903 = vsel %vm889, %v877, 0
      %v906 = vsel %vm889, %v878, 0
      %v909 = vsel %vm889, %v879, 0
      %v912 = vsel %vm889, %v880, 0
      %vm914 = vcmask 1041408
      %v916 = vsel %vm914, %v881, 0
      %918 = vmatprep.subr.bf16.mxu0 0
      %919 = vmatpush1.bf16.msra.mxu0 0
      %920 = vmatprep.subr.bf16.mxu0 0
      %921 = vmatpush1.bf16.msra.mxu0 0
      %922 = vmatprep.subr.bf16.mxu0 0
      %923 = vmatpush1.bf16.msra.mxu0 0
      %924 = vmatprep.subr.bf16.mxu0 0
      %925 = vmatpush1.bf16.msra.mxu0 0
      %926 = vmatprep.subr.bf16.mxu0 0
      %927 = vmatpush1.bf16.msra.mxu0 0
      %928 = vmatprep.subr.bf16.mxu0 0
      %929 = vmatpush1.bf16.msra.mxu0 0
      %930 = vmatprep.subr.bf16.mxu0 0
      %931 = vmatpush1.bf16.msra.mxu0 0
      %932 = vmatprep.subr.bf16.mxu0 0
      %933 = vmatpush1.bf16.msra.mxu0 %v916
      %934 = vmatprep.subr.bf16.mxu0 0
      %935 = vmatpush2.bf16.msra.mxu0 0
      %936 = vmatprep.subr.bf16.mxu0 0
      %937 = vmatpush2.bf16.msra.mxu0 0
      %938 = vmatprep.subr.bf16.mxu0 0
      %939 = vmatpush2.bf16.msra.mxu0 0
      %940 = vmatprep.subr.bf16.mxu0 0
      %941 = vmatpush2.bf16.msra.mxu0 0
      %942 = vmatprep.subr.bf16.mxu0 0
      %943 = vmatpush2.bf16.msra.mxu0 0
      %944 = vmatprep.subr.bf16.mxu0 0
      %945 = vmatpush2.bf16.msra.mxu0 0
      %946 = vmatprep.subr.bf16.mxu0 0
      %947 = vmatpush2.bf16.msra.mxu0 0
      %948 = vmatprep.subr.bf16.mxu0 0
      %949 = vmatpush2.bf16.msra.mxu0 0
      %950 = vmatprep.mubr.bf16.mxu0 0
      %951 = vmatmul.mubr.bf16.gmra.mxu0 %v891
      %v952 = vpop.f32.mrf.mxu0
      %v953 = vadd.f32 %v887, %v952
      %v954 = vpop.f32.mrf.mxu0
      %v955 = vpop.f32.mrf.mxu0
      %v956 = vadd.f32 %v887, %v955
      %v957 = vpop.f32.mrf.mxu0
      %958 = vmatprep.mubr.bf16.mxu0 0
      %959 = vmatmul.mubr.bf16.gmra.mxu0 %v894
      %v960 = vpop.f32.mrf.mxu0
      %v961 = vadd.f32 %v887, %v960
      %v962 = vpop.f32.mrf.mxu0
      %v963 = vpop.f32.mrf.mxu0
      %v964 = vadd.f32 %v887, %v963
      %v965 = vpop.f32.mrf.mxu0
      %966 = vmatprep.mubr.bf16.mxu0 0
      %967 = vmatmul.mubr.bf16.gmra.mxu0 %v897
      %v968 = vpop.f32.mrf.mxu0
      %v969 = vadd.f32 %v887, %v968
      %v970 = vpop.f32.mrf.mxu0
      %v971 = vpop.f32.mrf.mxu0
      %v972 = vadd.f32 %v887, %v971
      %v973 = vpop.f32.mrf.mxu0
      %974 = vmatprep.mubr.bf16.mxu0 0
      %975 = vmatmul.mubr.bf16.gmra.mxu0 %v900
      %v976 = vpop.f32.mrf.mxu0
      %v977 = vadd.f32 %v887, %v976
      %v978 = vpop.f32.mrf.mxu0
      %v979 = vpop.f32.mrf.mxu0
      %v980 = vadd.f32 %v887, %v979
      %v981 = vpop.f32.mrf.mxu0
      %982 = vmatprep.mubr.bf16.mxu0 0
      %983 = vmatmul.mubr.bf16.gmra.mxu0 %v903
      %v984 = vpop.f32.mrf.mxu0
      %v985 = vadd.f32 %v887, %v984
      %v986 = vpop.f32.mrf.mxu0
      %v987 = vpop.f32.mrf.mxu0
      %v988 = vadd.f32 %v887, %v987
      %v989 = vpop.f32.mrf.mxu0
      %990 = vmatprep.mubr.bf16.mxu0 0
      %991 = vmatmul.mubr.bf16.gmra.mxu0 %v906
      %v992 = vpop.f32.mrf.mxu0
      %v993 = vadd.f32 %v887, %v992
      %v994 = vpop.f32.mrf.mxu0
      %v995 = vpop.f32.mrf.mxu0
      %v996 = vadd.f32 %v887, %v995
      %v997 = vpop.f32.mrf.mxu0
      %998 = vmatprep.mubr.bf16.mxu0 0
      %999 = vmatmul.mubr.bf16.gmra.mxu0 %v909
      %v1000 = vpop.f32.mrf.mxu0
      %v1001 = vadd.f32 %v887, %v1000
      %v1002 = vpop.f32.mrf.mxu0
      %v1003 = vpop.f32.mrf.mxu0
      %v1004 = vadd.f32 %v887, %v1003
      %v1005 = vpop.f32.mrf.mxu0
      %1006 = vmatprep.mubr.bf16.mxu0 0
      %1007 = vmatmul.mubr.bf16.gmra.mxu0 %v912
      %v1008 = vpop.f32.mrf.mxu0
      %v1009 = vadd.f32 %v887, %v1008
      %v1010 = vpop.f32.mrf.mxu0
      %v1011 = vpop.f32.mrf.mxu0
      %v1012 = vadd.f32 %v887, %v1011
      %v1013 = vpop.f32.mrf.mxu0
      %1014 = vdwg.mxu0
      %v1015 = vsel %vm731, %v953, -inf
      %1016 = vmax.xlane.f32.xlu0 %v1015
      %v1017 = vpop.xlane.xlu0 %1016
      %v1018 = vsel %vm731, %v956, -inf
      %1019 = vmax.xlane.f32.xlu0 %v1018
      %v1020 = vpop.xlane.xlu0 %1019
      %v1021 = vsel %vm731, %v961, -inf
      %1022 = vmax.xlane.f32.xlu0 %v1021
      %v1023 = vpop.xlane.xlu0 %1022
      %v1024 = vsel %vm731, %v964, -inf
      %1025 = vmax.xlane.f32.xlu0 %v1024
      %v1026 = vpop.xlane.xlu0 %1025
      %v1027 = vsel %vm731, %v969, -inf
      %1028 = vmax.xlane.f32.xlu0 %v1027
      %v1029 = vpop.xlane.xlu0 %1028
      %v1030 = vsel %vm731, %v972, -inf
      %1031 = vmax.xlane.f32.xlu0 %v1030
      %v1032 = vpop.xlane.xlu0 %1031
      %v1033 = vsel %vm731, %v977, -inf
      %1034 = vmax.xlane.f32.xlu0 %v1033
      %v1035 = vpop.xlane.xlu0 %1034
      %v1036 = vsel %vm731, %v980, -inf
      %1037 = vmax.xlane.f32.xlu0 %v1036
      %v1038 = vpop.xlane.xlu0 %1037
      %v1039 = vsel %vm731, %v985, -inf
      %1040 = vmax.xlane.f32.xlu0 %v1039
      %v1041 = vpop.xlane.xlu0 %1040
      %v1042 = vsel %vm731, %v988, -inf
      %1043 = vmax.xlane.f32.xlu0 %v1042
      %v1044 = vpop.xlane.xlu0 %1043
      %v1045 = vsel %vm731, %v993, -inf
      %1046 = vmax.xlane.f32.xlu0 %v1045
      %v1047 = vpop.xlane.xlu0 %1046
      %v1048 = vsel %vm731, %v996, -inf
      %1049 = vmax.xlane.f32.xlu0 %v1048
      %v1050 = vpop.xlane.xlu0 %1049
      %v1051 = vsel %vm731, %v1001, -inf
      %1052 = vmax.xlane.f32.xlu0 %v1051
      %v1053 = vpop.xlane.xlu0 %1052
      %v1054 = vsel %vm731, %v1004, -inf
      %1055 = vmax.xlane.f32.xlu0 %v1054
      %v1056 = vpop.xlane.xlu0 %1055
      %v1057 = vsel %vm731, %v1009, -inf
      %1058 = vmax.xlane.f32.xlu0 %v1057
      %v1059 = vpop.xlane.xlu0 %1058
      %v1060 = vsel %vm731, %v1012, -inf
      %1061 = vmax.xlane.f32.xlu0 %v1060
      %v1062 = vpop.xlane.xlu0 %1061
      %v1063 = vsub.f32 %v953, %v1017
      %v1064 = vsub.f32 %v956, %v1020
      %v1065 = vsub.f32 %v961, %v1023
      %v1066 = vsub.f32 %v964, %v1026
      %v1067 = vsub.f32 %v969, %v1029
      %v1068 = vsub.f32 %v972, %v1032
      %v1069 = vsub.f32 %v977, %v1035
      %v1070 = vsub.f32 %v980, %v1038
      %v1071 = vsub.f32 %v985, %v1041
      %v1072 = vsub.f32 %v988, %v1044
      %v1073 = vsub.f32 %v993, %v1047
      %v1074 = vsub.f32 %v996, %v1050
      %v1075 = vsub.f32 %v1001, %v1053
      %v1076 = vsub.f32 %v1004, %v1056
      %v1077 = vsub.f32 %v1009, %v1059
      %v1078 = vsub.f32 %v1012, %v1062
      %v1079 = vmul.f32 %v1063, 1.442695
      %v1080 = vpow.pop %v1079
      %v1081 = vmul.f32 %v1064, 1.442695
      %v1082 = vpow.pop %v1081
      %v1083 = vmul.f32 %v1065, 1.442695
      %v1084 = vpow.pop %v1083
      %v1085 = vmul.f32 %v1066, 1.442695
      %v1086 = vpow.pop %v1085
      %v1087 = vmul.f32 %v1067, 1.442695
      %v1088 = vpow.pop %v1087
      %v1089 = vmul.f32 %v1068, 1.442695
      %v1090 = vpow.pop %v1089
      %v1091 = vmul.f32 %v1069, 1.442695
      %v1092 = vpow.pop %v1091
      %v1093 = vmul.f32 %v1070, 1.442695
      %v1094 = vpow.pop %v1093
      %v1095 = vmul.f32 %v1071, 1.442695
      %v1096 = vpow.pop %v1095
      %v1097 = vmul.f32 %v1072, 1.442695
      %v1098 = vpow.pop %v1097
      %v1099 = vmul.f32 %v1073, 1.442695
      %v1100 = vpow.pop %v1099
      %v1101 = vmul.f32 %v1074, 1.442695
      %v1102 = vpow.pop %v1101
      %v1103 = vmul.f32 %v1075, 1.442695
      %v1104 = vpow.pop %v1103
      %v1105 = vmul.f32 %v1076, 1.442695
      %v1106 = vpow.pop %v1105
      %v1107 = vmul.f32 %v1077, 1.442695
      %v1108 = vpow.pop %v1107
      %v1109 = vmul.f32 %v1078, 1.442695
      %v1110 = vpow.pop %v1109
      %v1111 = vsel %vm731, %v1080, 0.0
      %1112 = vadd.xlane.f32.xlu0 %v1111
      %v1113 = vpop.xlane.xlu0 %1112
      %v1114 = vsel %vm731, %v1082, 0.0
      %1115 = vadd.xlane.f32.xlu0 %v1114
      %v1116 = vpop.xlane.xlu0 %1115
      %v1117 = vsel %vm731, %v1084, 0.0
      %1118 = vadd.xlane.f32.xlu0 %v1117
      %v1119 = vpop.xlane.xlu0 %1118
      %v1120 = vsel %vm731, %v1086, 0.0
      %1121 = vadd.xlane.f32.xlu0 %v1120
      %v1122 = vpop.xlane.xlu0 %1121
      %v1123 = vsel %vm731, %v1088, 0.0
      %1124 = vadd.xlane.f32.xlu0 %v1123
      %v1125 = vpop.xlane.xlu0 %1124
      %v1126 = vsel %vm731, %v1090, 0.0
      %1127 = vadd.xlane.f32.xlu0 %v1126
      %v1128 = vpop.xlane.xlu0 %1127
      %v1129 = vsel %vm731, %v1092, 0.0
      %1130 = vadd.xlane.f32.xlu0 %v1129
      %v1131 = vpop.xlane.xlu0 %1130
      %v1132 = vsel %vm731, %v1094, 0.0
      %1133 = vadd.xlane.f32.xlu0 %v1132
      %v1134 = vpop.xlane.xlu0 %1133
      %v1135 = vsel %vm731, %v1096, 0.0
      %1136 = vadd.xlane.f32.xlu0 %v1135
      %v1137 = vpop.xlane.xlu0 %1136
      %v1138 = vsel %vm731, %v1098, 0.0
      %1139 = vadd.xlane.f32.xlu0 %v1138
      %v1140 = vpop.xlane.xlu0 %1139
      %v1141 = vsel %vm731, %v1100, 0.0
      %1142 = vadd.xlane.f32.xlu0 %v1141
      %v1143 = vpop.xlane.xlu0 %1142
      %v1144 = vsel %vm731, %v1102, 0.0
      %1145 = vadd.xlane.f32.xlu0 %v1144
      %v1146 = vpop.xlane.xlu0 %1145
      %v1147 = vsel %vm731, %v1104, 0.0
      %1148 = vadd.xlane.f32.xlu0 %v1147
      %v1149 = vpop.xlane.xlu0 %1148
      %v1150 = vsel %vm731, %v1106, 0.0
      %1151 = vadd.xlane.f32.xlu0 %v1150
      %v1152 = vpop.xlane.xlu0 %1151
      %v1153 = vsel %vm731, %v1108, 0.0
      %1154 = vadd.xlane.f32.xlu0 %v1153
      %v1155 = vpop.xlane.xlu0 %1154
      %v1156 = vsel %vm731, %v1110, 0.0
      %1157 = vadd.xlane.f32.xlu0 %v1156
      %v1158 = vpop.xlane.xlu0 %1157
      %v1159 = vrcp.pop %v1113
      %v1160 = vrcp.pop %v1116
      %v1161 = vrcp.pop %v1119
      %v1162 = vrcp.pop %v1122
      %v1163 = vrcp.pop %v1125
      %v1164 = vrcp.pop %v1128
      %v1165 = vrcp.pop %v1131
      %v1166 = vrcp.pop %v1134
      %v1167 = vrcp.pop %v1137
      %v1168 = vrcp.pop %v1140
      %v1169 = vrcp.pop %v1143
      %v1170 = vrcp.pop %v1146
      %v1171 = vrcp.pop %v1149
      %v1172 = vrcp.pop %v1152
      %v1173 = vrcp.pop %v1155
      %v1174 = vrcp.pop %v1158
      %v1175 = vmul.f32 %v1113, %v1159
      %v1176 = vmul.f32 %v1116, %v1160
      %v1177 = vmul.f32 %v1119, %v1161
      %v1178 = vmul.f32 %v1122, %v1162
      %v1179 = vmul.f32 %v1125, %v1163
      %v1180 = vmul.f32 %v1128, %v1164
      %v1181 = vmul.f32 %v1131, %v1165
      %v1182 = vmul.f32 %v1134, %v1166
      %v1183 = vmul.f32 %v1137, %v1167
      %v1184 = vmul.f32 %v1140, %v1168
      %v1185 = vmul.f32 %v1143, %v1169
      %v1186 = vmul.f32 %v1146, %v1170
      %v1187 = vmul.f32 %v1149, %v1171
      %v1188 = vmul.f32 %v1152, %v1172
      %v1189 = vmul.f32 %v1155, %v1173
      %v1190 = vmul.f32 %v1158, %v1174
      %v1191 = vsub.f32 2.0, %v1175
      %v1192 = vsub.f32 2.0, %v1176
      %v1193 = vsub.f32 2.0, %v1177
      %v1194 = vsub.f32 2.0, %v1178
      %v1195 = vsub.f32 2.0, %v1179
      %v1196 = vsub.f32 2.0, %v1180
      %v1197 = vsub.f32 2.0, %v1181
      %v1198 = vsub.f32 2.0, %v1182
      %v1199 = vsub.f32 2.0, %v1183
      %v1200 = vsub.f32 2.0, %v1184
      %v1201 = vsub.f32 2.0, %v1185
      %v1202 = vsub.f32 2.0, %v1186
      %v1203 = vsub.f32 2.0, %v1187
      %v1204 = vsub.f32 2.0, %v1188
      %v1205 = vsub.f32 2.0, %v1189
      %v1206 = vsub.f32 2.0, %v1190
      %v1207 = vmul.f32 %v1159, %v1191
      %v1208 = vmul.f32 %v1160, %v1192
      %v1209 = vmul.f32 %v1161, %v1193
      %v1210 = vmul.f32 %v1162, %v1194
      %v1211 = vmul.f32 %v1163, %v1195
      %v1212 = vmul.f32 %v1164, %v1196
      %v1213 = vmul.f32 %v1165, %v1197
      %v1214 = vmul.f32 %v1166, %v1198
      %v1215 = vmul.f32 %v1167, %v1199
      %v1216 = vmul.f32 %v1168, %v1200
      %v1217 = vmul.f32 %v1169, %v1201
      %v1218 = vmul.f32 %v1170, %v1202
      %v1219 = vmul.f32 %v1171, %v1203
      %v1220 = vmul.f32 %v1172, %v1204
      %v1221 = vmul.f32 %v1173, %v1205
      %v1222 = vmul.f32 %v1174, %v1206
      %v1223 = vmul.f32 %v1080, %v1207
      %v1224 = vmul.f32 %v1082, %v1208
      %v1225 = vmul.f32 %v1084, %v1209
      %v1226 = vmul.f32 %v1086, %v1210
      %v1227 = vmul.f32 %v1088, %v1211
      %v1228 = vmul.f32 %v1090, %v1212
      %v1229 = vmul.f32 %v1092, %v1213
      %v1230 = vmul.f32 %v1094, %v1214
      %v1231 = vmul.f32 %v1096, %v1215
      %v1232 = vmul.f32 %v1098, %v1216
      %v1233 = vmul.f32 %v1100, %v1217
      %v1234 = vmul.f32 %v1102, %v1218
      %v1235 = vmul.f32 %v1104, %v1219
      %v1236 = vmul.f32 %v1106, %v1220
      %v1237 = vmul.f32 %v1108, %v1221
      %v1238 = vmul.f32 %v1110, %v1222
      %1239 = vst.msk [vmem:[%s334] sm:$0xff] %vm731, %v1223
      %1240 = vst.msk [vmem:[%s334 + $0x8] sm:$0xff] %vm731, %v1224
      %1241 = vst.msk [vmem:[%s334 + $0x10] sm:$0xff] %vm731, %v1225
      %1242 = vst.msk [vmem:[%s334 + $0x18] sm:$0xff] %vm731, %v1226
      %1243 = vst.msk [vmem:[%s334 + $0x20] sm:$0xff] %vm731, %v1227
      %1244 = vst.msk [vmem:[%s334 + $0x28] sm:$0xff] %vm731, %v1228
      %1245 = vst.msk [vmem:[%s334 + $0x30] sm:$0xff] %vm731, %v1229
      %1246 = vst.msk [vmem:[%s334 + $0x38] sm:$0xff] %vm731, %v1230
      %1247 = vst.msk [vmem:[%s334 + $0x40] sm:$0xff] %vm731, %v1231
      %1248 = vst.msk [vmem:[%s334 + $0x48] sm:$0xff] %vm731, %v1232
      %1249 = vst.msk [vmem:[%s334 + $0x50] sm:$0xff] %vm731, %v1233
      %1250 = vst.msk [vmem:[%s334 + $0x58] sm:$0xff] %vm731, %v1234
      %1251 = vst.msk [vmem:[%s334 + $0x60] sm:$0xff] %vm731, %v1235
      %1252 = vst.msk [vmem:[%s334 + $0x68] sm:$0xff] %vm731, %v1236
      %1253 = vst.msk [vmem:[%s334 + $0x70] sm:$0xff] %vm731, %v1237
      %1254 = vst.msk [vmem:[%s334 + $0x78] sm:$0xff] %vm731, %v1238
      %s1255 = smul.u32 16, %s20
      %p1256 = scmp.lt.s32.totalorder %s1255, 31
      %s1257 = scalar_select %p1256, %s1255, 31
      %s1258 = smul.addr %s1257, 8
      %s1259 = scalar_lea.vmem %s9, %s1258
      // Predicated region
      $region57: #{classifier_forward.1} parent=55 // pred_check
        %p1260 = pneg %p232
      $region58: #{classifier_forward.1} parent=55 // pred_check_branch
        %1262 = sbr.rel (%p1260) target = $region60
      $region59: #{classifier_forward.1} parent=55 // pred_region
        %s1263 = smul.u32 16, %s20
      $region60: #{classifier_forward.1} parent=55 // pred_fallthru
        _
    $region56: #{classifier_forward.1} parent=5 // pred_fallthru
      _
    %p1264 = scmp.le.s32.totalorder 2, %s15
    // Predicated region
    $region61: #{classifier_forward.1} parent=5 // pred_check
      %p1265 = pneg %p1264
    $region62: #{classifier_forward.1} parent=5 // pred_check_branch
      %1267 = sbr.rel (%p1265) target = $region64
    $region63: #{classifier_forward.1} parent=5 // pred_region
      %s1268 = ssub.s32 %s15, 2
      // Predicated region
      $region65: #{classifier_forward.1} parent=63 // pred_check
        %p1269 = pneg %p238
      $region66: #{classifier_forward.1} parent=63 // pred_check_branch
        %1271 = sbr.rel (%p1269) target = $region68
      $region67: #{classifier_forward.1} parent=63 // pred_region
        %s1272 = smul.u32 16, %s21
        %p1273 = scmp.lt.s32.totalorder %s1272, 31
        %s1274 = scalar_select %p1273, %s1272, 31
        %s1275 = smul.addr %s1274, 8
        %s1276 = scalar_lea.vmem %s9, %s1275
      $region68: #{classifier_forward.1} parent=63 // pred_fallthru
        _
    $region64: #{classifier_forward.1} parent=5 // pred_fallthru
      _
  $region6: #{classifier_forward.1} parent=0 // loop_footer
    %s19 = sadd.s32 1, %s15
  $region7: #{classifier_forward.1} parent=0 // loop_footer_branch
    %14 = sbr.rel target = $region3
  $region8: #{classifier_forward.1} parent=0 // loop_exit
    _

</llo_original>
